<compile_context>
chip_gen: v7x
topology: tpu7x:2x2x1
jax: 0.10.0
libtpu: 0.0.40
codegen_flags: <defaults>
</compile_context>

<pallas_src>
import math

import jax
import jax.numpy as jnp
from jax.experimental import pallas as pl
from jax.experimental.pallas import tpu as pltpu


# --------------------------------------------------------------------------
# Kernel 1: global average pool over H*W + 1-D channel conv + sigmoid
# --------------------------------------------------------------------------
def _make_pool_conv_kernel(k, pad, hw):
    inv_hw = 1.0 / float(hw)

    def kernel(x_ref, w_ref, scale_ref):
        # x_ref:     (1, 1, C, HW_tile)   one batch element's spatial tile
        # w_ref:     (k, 1, 1, C)         conv taps broadcast along channels
        # scale_ref: (1, 1, C) f32        resident across the HW grid axis
        h = pl.program_id(1)
        nh = pl.num_programs(1)

        @pl.when(h == 0)
        def _init():
            scale_ref[...] = jnp.zeros_like(scale_ref)

        # Partial spatial sum of this tile, accumulated in fp32.
        scale_ref[...] += jnp.sum(x_ref[...].astype(jnp.float32), axis=3)

        @pl.when(h == nh - 1)
        def _finalize():
            m = scale_ref[...] * inv_hw                       # (1, 1, C) channel means
            c_dim = m.shape[-1]
            col = jax.lax.broadcasted_iota(jnp.int32, m.shape, 2)
            y = jnp.zeros_like(m)
            for j in range(k):                                # k is tiny & static
                s = j - pad                                   # tap offset along C
                sh = (-s) % c_dim
                shifted = m if sh == 0 else pltpu.roll(m, sh, 2)
                valid = (col + s >= 0) & (col + s < c_dim)    # zero padding at edges
                y = y + w_ref[j] * jnp.where(valid, shifted, 0.0)
            scale_ref[...] = jax.nn.sigmoid(y)

    return kernel


# --------------------------------------------------------------------------
# Kernel 2: streaming elementwise scale (kept in the input dtype)
# --------------------------------------------------------------------------
def _scale_kernel(x_ref, s_ref, o_ref):
    # x_ref: (R_tile, HW_tile) native dtype;  s_ref: (R_tile, 1) f32 scale
    o_ref[...] = x_ref[...] * s_ref[...].astype(x_ref.dtype)


# --------------------------------------------------------------------------
# Helpers
# --------------------------------------------------------------------------
def _adaptive_kernel_size(channels, kernel_size=3, gamma=2, beta=1):
    if channels is not None:
        t = int(abs(math.log(channels, 2) + beta) / gamma)
        kernel_size = max(t if t % 2 else t + 1, 3)
    assert kernel_size % 2 == 1
    return kernel_size


def _pick_tile(n, target, align):
    """Largest tile <= target that is a multiple of `align` and divides n;
    otherwise the full extent (always a legal block size)."""
    if n <= target:
        return n
    t = (target // align) * align
    while t >= align:
        if n % t == 0:
            return t
        t -= align
    return n


# --------------------------------------------------------------------------
# Wrapper
# --------------------------------------------------------------------------
def eca_forward(x, conv_weight, *, hw_tile_target=1024, row_tile_target=256):
    """x: (B, C, H, W).  conv_weight: (1, 1, k) Conv1d weight (no bias)."""
    B, C, H, W = x.shape
    HW = H * W
    w = conv_weight.reshape(-1).astype(jnp.float32)
    k = int(w.shape[0])
    pad = (k - 1) // 2

    # Taps as a tiny VMEM vector, pre-broadcast along C (k*C*4 bytes).
    w_vec = jnp.broadcast_to(w[:, None, None, None], (k, 1, 1, C))

    # ---- Kernel 1: pool + channel conv + sigmoid -> (B, 1, C) f32 scale ----
    hw_tile = _pick_tile(HW, hw_tile_target, 128)
    n_hw = HW // hw_tile
    x_pool = x.reshape(B, 1, C, HW)           # lane-dense spatial axis

    scale = pl.pallas_call(
        _make_pool_conv_kernel(k, pad, HW),
        out_shape=jax.ShapeDtypeStruct((B, 1, C), jnp.float32),
        grid_spec=pltpu.PrefetchScalarGridSpec(
            num_scalar_prefetch=0,
            grid=(B, n_hw),
            in_specs=[
                pl.BlockSpec((1, 1, C, hw_tile), lambda b, h: (b, 0, 0, h)),
                pl.BlockSpec((k, 1, 1, C), lambda b, h: (0, 0, 0, 0)),
            ],
            out_specs=pl.BlockSpec((1, 1, C), lambda b, h: (b, 0, 0)),
        ),
        compiler_params=pltpu.CompilerParams(
            dimension_semantics=("parallel", "arbitrary"),
            vmem_limit_bytes=32 * 1024 * 1024),
    )(x_pool, w_vec)

    # ---- Kernel 2: out = x * scale, streamed over lane-dense tiles ----
    x_flat = x.reshape(B * C, HW)
    s_flat = scale.reshape(B * C, 1)          # row order matches x_flat (b-major, then c)
    r_tile = _pick_tile(B * C, row_tile_target, 8)
    hw_tile2 = _pick_tile(HW, hw_tile_target, 128)

    out = pl.pallas_call(
        _scale_kernel,
        out_shape=jax.ShapeDtypeStruct((B * C, HW), x.dtype),
        grid_spec=pltpu.PrefetchScalarGridSpec(
            num_scalar_prefetch=0,
            grid=(B * C // r_tile, HW // hw_tile2),
            in_specs=[
                pl.BlockSpec((r_tile, hw_tile2), lambda r, h: (r, h)),
                pl.BlockSpec((r_tile, 1), lambda r, h: (r, 0)),
            ],
            out_specs=pl.BlockSpec((r_tile, hw_tile2), lambda r, h: (r, h)),
        ),
        compiler_params=pltpu.CompilerParams(
            dimension_semantics=("parallel", "parallel"),
            vmem_limit_bytes=32 * 1024 * 1024),
    )(x_flat, s_flat)

    return out.reshape(B, C, H, W)


if __name__ == "__main__":
    B, C, H, W = 2, 4, 16, 16
    k = _adaptive_kernel_size(channels=C)     # -> 3 for C=4

    key = jax.random.PRNGKey(0)
    kx, kw = jax.random.split(key)
    x = jax.random.normal(kx, (B, C, H, W), dtype=jnp.float32)
    # deterministic synthetic Conv1d(1, 1, k, bias=False) weight
    conv_weight = jax.random.normal(kw, (1, 1, k), dtype=jnp.float32) * 0.1

    out = eca_forward(x, conv_weight)
    out = jax.block_until_ready(out)

    # sanity check against a pure-JAX reference of the same math
    m_ref = x.mean(axis=(2, 3))                                     # (B, C)
    pad = (k - 1) // 2
    m_pad = jnp.pad(m_ref, ((0, 0), (pad, pad)))
    w = conv_weight.reshape(-1)
    y_ref = sum(w[j] * m_pad[:, j:j + C] for j in range(k))         # (B, C)
    ref = x * jax.nn.sigmoid(y_ref)[:, :, None, None]
    assert jnp.allclose(out, ref, atol=1e-5, rtol=1e-5), "mismatch vs reference"

    print("KERNEL_OK")
</pallas_src>

<mosaic_0001>
module attributes {stable_mosaic.version = 11 : i64} {
  func.func @kernel(%arg0: i32, %arg1: i32, %arg2: memref<1x1x4x256xf32, #tpu.memory_space<vmem>>, %arg3: memref<3x1x1x4xf32, #tpu.memory_space<vmem>>, %arg4: memref<1x1x4xf32, #tpu.memory_space<vmem>>) attributes {dimension_semantics = [#tpu.dimension_semantics<parallel>, #tpu.dimension_semantics<arbitrary>], iteration_bounds = array<i64: 2, 1>, scalar_prefetch = 0 : i64, scratch_operands = 0 : i64, tpu.core_type = #tpu.core_type<tc>, window_params = [{transform_indices = @transform_0, window_bounds = array<i64: 1, 1, 4, 256>}, {pipeline_mode = #tpu.pipeline_mode<synchronous>, transform_indices = @transform_1, window_bounds = array<i64: 3, 1, 1, 4>}, {transform_indices = @transform_2, window_bounds = array<i64: 1, 1, 4>}]} {
    %c0_i32 = arith.constant 0 : i32
    %0 = arith.cmpi eq, %arg1, %c0_i32 : i32
    %1 = arith.extui %0 : i1 to i32
    %c0_i32_0 = arith.constant 0 : i32
    %2 = arith.cmpi ne, %1, %c0_i32_0 : i32
    scf.if %2 {
      %cst_12 = arith.constant 0.000000e+00 : f32
      %11 = vector.broadcast %cst_12 : f32 to vector<1x1x4xf32>
      %c0_13 = arith.constant 0 : index
      %c0_14 = arith.constant 0 : index
      %c0_15 = arith.constant 0 : index
      %12 = vector.load %arg4[%c0_13, %c0_14, %c0_15] : memref<1x1x4xf32, #tpu.memory_space<vmem>>, vector<1x1x4xf32>
      tpu.vector_store %arg4[%c0_13, %c0_14, %c0_15], %11 {strides = array<i32>} : memref<1x1x4xf32, #tpu.memory_space<vmem>>, vector<1x1x4xf32>,
    } else {
    }
    %c0 = arith.constant 0 : index
    %c0_1 = arith.constant 0 : index
    %c0_2 = arith.constant 0 : index
    %3 = vector.load %arg4[%c0, %c0_1, %c0_2] : memref<1x1x4xf32, #tpu.memory_space<vmem>>, vector<1x1x4xf32>
    %c0_3 = arith.constant 0 : index
    %c0_4 = arith.constant 0 : index
    %c0_5 = arith.constant 0 : index
    %c0_6 = arith.constant 0 : index
    %4 = vector.load %arg2[%c0_3, %c0_4, %c0_5, %c0_6] : memref<1x1x4x256xf32, #tpu.memory_space<vmem>>, vector<1x1x4x256xf32>
    %cst = arith.constant dense<0.000000e+00> : vector<1x1x4xf32>
    %5 = vector.multi_reduction <add>, %4, %cst [3] : vector<1x1x4x256xf32> to vector<1x1x4xf32>
    %6 = arith.addf %3, %5 : vector<1x1x4xf32>
    %c0_7 = arith.constant 0 : index
    %c0_8 = arith.constant 0 : index
    %c0_9 = arith.constant 0 : index
    %7 = vector.load %arg4[%c0_7, %c0_8, %c0_9] : memref<1x1x4xf32, #tpu.memory_space<vmem>>, vector<1x1x4xf32>
    tpu.vector_store %arg4[%c0_7, %c0_8, %c0_9], %6 {strides = array<i32>} : memref<1x1x4xf32, #tpu.memory_space<vmem>>, vector<1x1x4xf32>,
    %c0_i32_10 = arith.constant 0 : i32
    %8 = arith.cmpi eq, %arg1, %c0_i32_10 : i32
    %9 = arith.extui %8 : i1 to i32
    %c0_i32_11 = arith.constant 0 : i32
    %10 = arith.cmpi ne, %9, %c0_i32_11 : i32
    scf.if %10 {
      %c0_12 = arith.constant 0 : index
      %c0_13 = arith.constant 0 : index
      %c0_14 = arith.constant 0 : index
      %11 = vector.load %arg4[%c0_12, %c0_13, %c0_14] : memref<1x1x4xf32, #tpu.memory_space<vmem>>, vector<1x1x4xf32>
      %cst_15 = arith.constant 3.906250e-03 : f32
      %12 = vector.broadcast %cst_15 : f32 to vector<1x1x4xf32>
      %13 = arith.mulf %11, %12 : vector<1x1x4xf32>
      %14 = tpu.iota {dimensions = array<i32: 2>} : vector<1x1x4xi32>
      %cst_16 = arith.constant 0.000000e+00 : f32
      %15 = vector.broadcast %cst_16 : f32 to vector<1x1x4xf32>
      %c1_i32 = arith.constant 1 : i32
      %16 = tpu.dynamic_rotate %13 by %c1_i32 dim 2 : vector<1x1x4xf32>, i32 -> vector<1x1x4xf32>
      %c-1_i32 = arith.constant -1 : i32
      %17 = vector.broadcast %c-1_i32 : i32 to vector<1x1x4xi32>
      %18 = arith.addi %14, %17 : vector<1x1x4xi32>
      %c0_i32_17 = arith.constant 0 : i32
      %19 = vector.broadcast %c0_i32_17 : i32 to vector<1x1x4xi32>
      %20 = arith.cmpi sge, %18, %19 : vector<1x1x4xi32>
      %c-1_i32_18 = arith.constant -1 : i32
      %21 = vector.broadcast %c-1_i32_18 : i32 to vector<1x1x4xi32>
      %22 = arith.addi %14, %21 : vector<1x1x4xi32>
      %c4_i32 = arith.constant 4 : i32
      %23 = vector.broadcast %c4_i32 : i32 to vector<1x1x4xi32>
      %24 = arith.cmpi slt, %22, %23 : vector<1x1x4xi32>
      %25 = arith.andi %20, %24 : vector<1x1x4xi1>
      %c0_19 = arith.constant 0 : index
      %c0_20 = arith.constant 0 : index
      %c0_21 = arith.constant 0 : index
      %c0_22 = arith.constant 0 : index
      %26 = vector.load %arg3[%c0_19, %c0_20, %c0_21, %c0_22] : memref<3x1x1x4xf32, #tpu.memory_space<vmem>>, vector<1x1x1x4xf32>
      %27 = vector.shape_cast %26 : vector<1x1x1x4xf32> to vector<1x1x4xf32>
      %cst_23 = arith.constant 0.000000e+00 : f32
      %28 = vector.broadcast %cst_23 : f32 to vector<1x1x4xf32>
      %29 = arith.select %25, %16, %28 : vector<1x1x4xi1>, vector<1x1x4xf32>
      %30 = arith.mulf %27, %29 : vector<1x1x4xf32>
      %31 = arith.addf %15, %30 : vector<1x1x4xf32>
      %c0_i32_24 = arith.constant 0 : i32
      %32 = vector.broadcast %c0_i32_24 : i32 to vector<1x1x4xi32>
      %33 = arith.addi %14, %32 : vector<1x1x4xi32>
      %c0_i32_25 = arith.constant 0 : i32
      %34 = vector.broadcast %c0_i32_25 : i32 to vector<1x1x4xi32>
      %35 = arith.cmpi sge, %33, %34 : vector<1x1x4xi32>
      %c0_i32_26 = arith.constant 0 : i32
      %36 = vector.broadcast %c0_i32_26 : i32 to vector<1x1x4xi32>
      %37 = arith.addi %14, %36 : vector<1x1x4xi32>
      %c4_i32_27 = arith.constant 4 : i32
      %38 = vector.broadcast %c4_i32_27 : i32 to vector<1x1x4xi32>
      %39 = arith.cmpi slt, %37, %38 : vector<1x1x4xi32>
      %40 = arith.andi %35, %39 : vector<1x1x4xi1>
      %c1 = arith.constant 1 : index
      %c0_28 = arith.constant 0 : index
      %c0_29 = arith.constant 0 : index
      %c0_30 = arith.constant 0 : index
      %41 = vector.load %arg3[%c1, %c0_28, %c0_29, %c0_30] : memref<3x1x1x4xf32, #tpu.memory_space<vmem>>, vector<1x1x1x4xf32>
      %42 = vector.shape_cast %41 : vector<1x1x1x4xf32> to vector<1x1x4xf32>
      %cst_31 = arith.constant 0.000000e+00 : f32
      %43 = vector.broadcast %cst_31 : f32 to vector<1x1x4xf32>
      %44 = arith.select %40, %13, %43 : vector<1x1x4xi1>, vector<1x1x4xf32>
      %45 = arith.mulf %42, %44 : vector<1x1x4xf32>
      %46 = arith.addf %31, %45 : vector<1x1x4xf32>
      %c3_i32 = arith.constant 3 : i32
      %47 = tpu.dynamic_rotate %13 by %c3_i32 dim 2 : vector<1x1x4xf32>, i32 -> vector<1x1x4xf32>
      %c1_i32_32 = arith.constant 1 : i32
      %48 = vector.broadcast %c1_i32_32 : i32 to vector<1x1x4xi32>
      %49 = arith.addi %14, %48 : vector<1x1x4xi32>
      %c0_i32_33 = arith.constant 0 : i32
      %50 = vector.broadcast %c0_i32_33 : i32 to vector<1x1x4xi32>
      %51 = arith.cmpi sge, %49, %50 : vector<1x1x4xi32>
      %c1_i32_34 = arith.constant 1 : i32
      %52 = vector.broadcast %c1_i32_34 : i32 to vector<1x1x4xi32>
      %53 = arith.addi %14, %52 : vector<1x1x4xi32>
      %c4_i32_35 = arith.constant 4 : i32
      %54 = vector.broadcast %c4_i32_35 : i32 to vector<1x1x4xi32>
      %55 = arith.cmpi slt, %53, %54 : vector<1x1x4xi32>
      %56 = arith.andi %51, %55 : vector<1x1x4xi1>
      %c2 = arith.constant 2 : index
      %c0_36 = arith.constant 0 : index
      %c0_37 = arith.constant 0 : index
      %c0_38 = arith.constant 0 : index
      %57 = vector.load %arg3[%c2, %c0_36, %c0_37, %c0_38] : memref<3x1x1x4xf32, #tpu.memory_space<vmem>>, vector<1x1x1x4xf32>
      %58 = vector.shape_cast %57 : vector<1x1x1x4xf32> to vector<1x1x4xf32>
      %cst_39 = arith.constant 0.000000e+00 : f32
      %59 = vector.broadcast %cst_39 : f32 to vector<1x1x4xf32>
      %60 = arith.select %56, %47, %59 : vector<1x1x4xi1>, vector<1x1x4xf32>
      %61 = arith.mulf %58, %60 : vector<1x1x4xf32>
      %62 = arith.addf %46, %61 : vector<1x1x4xf32>
      %63 = arith.negf %62 : vector<1x1x4xf32>
      %64 = math.exp %63 : vector<1x1x4xf32>
      %cst_40 = arith.constant 1.000000e+00 : f32
      %65 = vector.broadcast %cst_40 : f32 to vector<1x1x4xf32>
      %66 = arith.addf %65, %64 : vector<1x1x4xf32>
      %67 = arith.divf %65, %66 : vector<1x1x4xf32>
      %c0_41 = arith.constant 0 : index
      %c0_42 = arith.constant 0 : index
      %c0_43 = arith.constant 0 : index
      %68 = vector.load %arg4[%c0_41, %c0_42, %c0_43] : memref<1x1x4xf32, #tpu.memory_space<vmem>>, vector<1x1x4xf32>
      tpu.vector_store %arg4[%c0_41, %c0_42, %c0_43], %67 {strides = array<i32>} : memref<1x1x4xf32, #tpu.memory_space<vmem>>, vector<1x1x4xf32>,
    } else {
    }
    return
  }
  func.func @transform_0(%arg0: i32, %arg1: i32) -> (i32, i32, i32, i32) {
    %c0_i32 = arith.constant 0 : i32
    %c0_i32_0 = arith.constant 0 : i32
    %c0_i32_1 = arith.constant 0 : i32
    return %arg0, %c0_i32, %c0_i32_0, %arg1 : i32, i32, i32, i32
  }
  func.func @transform_1(%arg0: i32, %arg1: i32) -> (i32, i32, i32, i32) {
    %c0_i32 = arith.constant 0 : i32
    %c0_i32_0 = arith.constant 0 : i32
    %c0_i32_1 = arith.constant 0 : i32
    %c0_i32_2 = arith.constant 0 : i32
    %c0_i32_3 = arith.constant 0 : i32
    return %c0_i32, %c0_i32_0, %c0_i32_1, %c0_i32_2 : i32, i32, i32, i32
  }
  func.func @transform_2(%arg0: i32, %arg1: i32) -> (i32, i32, i32) {
    %c0_i32 = arith.constant 0 : i32
    %c0_i32_0 = arith.constant 0 : i32
    %c0_i32_1 = arith.constant 0 : i32
    return %arg0, %c0_i32, %c0_i32_0 : i32, i32, i32
  }
}

</mosaic_0001>

<llo_original>
// kernel: tpu_custom_call.1
$region0: #{tpu_custom_call.1}
  #allocation0 [shape = 'u32[]', space=smem, size = 0x4, offset = 0x4, fixed_abs, tag = 'smem constant byte address 0x4 - core index']
  #allocation1 [shape = 'u32[144,128]{1,0:T(1,128)}', space=vmem, size = 0x12000, scoped, tag = 'internal scratch']
  %s0 = inlined_call_operand.hbm [shape: f32[2,1,4,256], index: 0, kind: input, shape index: {}]
  %s1 = inlined_call_operand.vmem [shape: f32[3,1,1,4], index: 1, kind: input, shape index: {}]
  %s2 = inlined_call_operand.hbm [shape: f32[2,1,4], index: 2, kind: output, shape index: {}]
  %s3 = sld [smem:[#allocation0]]
  $region53: #{tpu_custom_call.1} parent=0
    _
  %s5 = ssub.s32 1, %s3
  %s6 = scalar_select 0, %s5, %s3
  $region1: #{tpu_custom_call.1} parent=0
    #allocation2 [shape = 'u8[8192]{0}', space=vmem, size = 0x2000, scoped, tag = 'input window, operand 0']
    #allocation3 [shape = 's32[2]{0}', space=sflag, size = 0x8, scoped, tag = 'scoped memory for tpu_custom_call.1']
    #allocation4 [shape = 's32[2]{0}', space=sflag, size = 0x8, scoped, tag = 'scoped memory for tpu_custom_call.1']
    #allocation5 [shape = 'u8[1024]{0}', space=vmem, size = 0x400, scoped, tag = 'output window, operand 0']
    %7 = vsyncpa [#allocation3], 0
    %s8 = scalar_lea.sflag [#allocation3], 1
    %9 = vsyncpa %s8, 0
    %10 = vsyncpa [#allocation4], 0
    %s11 = scalar_lea.sflag [#allocation4], 1
    %12 = vsyncpa %s11, 0
    loop: start=0, step=1, limit=4
    $region2: #{tpu_custom_call.1} parent=1 // loop_pre_header
      _
    $region3: #{tpu_custom_call.1} parent=1 // loop_header
      %s14 = sphi 0, %s18
      %p15 = scmp.ge.s32.totalorder %s14, 4
      %s21 = sphi 0, %s33
      %s22 = sphi 0, %s29
      %s23 = sphi 0, %s21
      %s24 = sphi 0, %s22
      %s25 = sphi 0, %s23
      %s26 = sphi 0, %s24
      %s38 = sphi 0, %s40
      %s41 = sphi 0, %s38
      %s42 = sphi 0, %s41
      %s58 = sphi 0, %s42
      %s62 = sphi 0, %s62
      %s64 = sphi 0, %s62
      %s65 = sphi 0, %s64
      %s79 = sphi 0, %s65
      %s85 = sphi 0, %s87
      %s88 = sphi 0, %s85
      %s89 = sphi 0, %s88
      %s105 = sphi 0, %s89
    $region4: #{tpu_custom_call.1} parent=1 // loop_header_branch
      %17 = sbr.rel (%p15) target = $region8
    $region5: #{tpu_custom_call.1} parent=1 // loop_body
      %s19 = ssub.s32 %s14, 1
      %s20 = ssub.s32 %s14, 2
      %s27 = sadd.s32 1, %s22
      %p28 = scmp.ge.s32.totalorder %s27, 1
      %s29 = scalar_select %p28, 0, %s27
      %s30 = sadd.s32 1, %s21
      %s31 = scalar_select %p28, %s30, %s21
      %p32 = scmp.ge.s32.totalorder %s31, 2
      %s33 = scalar_select %p32, 0, %s31
      %s34 = ssub.s32 %s21, %s33
      %s35 = ssub.s32 %s22, %s29
      %s36 = sor.u32 %s34, %s35
      %p37 = scmp.eq.s32.totalorder %s36, 0
      %s39 = sadd.s32 %s38, 1
      %s40 = scalar_select %p37, %s38, %s39
      %p43 = pneg %p37
      %p44 = scmp.eq.s32.totalorder %s14, 1
      %p45 = por %p43, %p44
      %p46 = scmp.ne.s32.totalorder %s38, %s41
      %p47 = scmp.eq.s32.totalorder %s14, 0
      %p48 = por %p46, %p47
      %p49 = scmp.ne.s32.totalorder %s38, %s41
      %p50 = scmp.eq.s32.totalorder %s19, 1
      %p51 = por %p49, %p50
      %p52 = scmp.ne.s32.totalorder %s41, %s42
      %p53 = scmp.eq.s32.totalorder %s19, 0
      %p54 = por %p52, %p53
      %p55 = scmp.ne.s32.totalorder %s41, %s42
      %p56 = scmp.eq.s32.totalorder %s20, 1
      %p57 = por %p55, %p56
      %p59 = scmp.ne.s32.totalorder %s42, %s58
      %p60 = scmp.eq.s32.totalorder %s20, 0
      %p61 = por %p59, %p60
      %s63 = sadd.s32 %s62, 1
      %p66 = scmp.eq.s32.totalorder %s14, 1
      %p67 = scmp.ne.s32.totalorder %s62, %s64
      %p68 = scmp.eq.s32.totalorder %s14, 0
      %p69 = por %p67, %p68
      %p70 = scmp.ne.s32.totalorder %s62, %s64
      %p71 = scmp.eq.s32.totalorder %s19, 1
      %p72 = por %p70, %p71
      %p73 = scmp.ne.s32.totalorder %s64, %s65
      %p74 = scmp.eq.s32.totalorder %s19, 0
      %p75 = por %p73, %p74
      %p76 = scmp.ne.s32.totalorder %s64, %s65
      %p77 = scmp.eq.s32.totalorder %s20, 1
      %p78 = por %p76, %p77
      %p80 = scmp.ne.s32.totalorder %s65, %s79
      %p81 = scmp.eq.s32.totalorder %s20, 0
      %p82 = por %p80, %p81
      %s83 = ssub.s32 %s21, %s33
      %p84 = scmp.eq.s32.totalorder %s83, 0
      %s86 = sadd.s32 %s85, 1
      %s87 = scalar_select %p84, %s85, %s86
      %p90 = pneg %p84
      %p91 = scmp.eq.s32.totalorder %s14, 1
      %p92 = por %p90, %p91
      %p93 = scmp.ne.s32.totalorder %s85, %s88
      %p94 = scmp.eq.s32.totalorder %s14, 0
      %p95 = por %p93, %p94
      %p96 = scmp.ne.s32.totalorder %s85, %s88
      %p97 = scmp.eq.s32.totalorder %s19, 1
      %p98 = por %p96, %p97
      %p99 = scmp.ne.s32.totalorder %s88, %s89
      %p100 = scmp.eq.s32.totalorder %s19, 0
      %p101 = por %p99, %p100
      %p102 = scmp.ne.s32.totalorder %s88, %s89
      %p103 = scmp.eq.s32.totalorder %s20, 1
      %p104 = por %p102, %p103
      %p106 = scmp.ne.s32.totalorder %s89, %s105
      %p107 = scmp.eq.s32.totalorder %s20, 0
      %p108 = por %p106, %p107
      %p109 = scmp.le.s32.totalorder 1, %s14
      %p110 = scmp.lt.s32.totalorder %s14, 3
      %p111 = pnand %p109, %p110
      %p112 = pneg %p111
      // Predicated region
      $region9: #{tpu_custom_call.1} parent=5 // pred_check
        _
      $region10: #{tpu_custom_call.1} parent=5 // pred_check_branch
        %114 = sbr.rel (%p111) target = $region12
      $region11: #{tpu_custom_call.1} parent=5 // pred_region
        %s115 = ssub.s32 %s14, 1
        // Predicated region
        $region13: #{tpu_custom_call.1} parent=11 // pred_check
          %p116 = pneg %p75
        $region14: #{tpu_custom_call.1} parent=11 // pred_check_branch
          %118 = sbr.rel (%p116) target = $region16
        $region15: #{tpu_custom_call.1} parent=11 // pred_region
          _
        $region16: #{tpu_custom_call.1} parent=11 // pred_fallthru
          _
      $region12: #{tpu_custom_call.1} parent=5 // pred_fallthru
        _
      %p119 = scmp.lt.s32.totalorder %s14, 2
      // Predicated region
      $region17: #{tpu_custom_call.1} parent=5 // pred_check
        %p120 = pneg %p119
      $region18: #{tpu_custom_call.1} parent=5 // pred_check_branch
        %122 = sbr.rel (%p120) target = $region20
      $region19: #{tpu_custom_call.1} parent=5 // pred_region
        // Predicated region
        $region21: #{tpu_custom_call.1} parent=19 // pred_check
          %p123 = pneg %p48
        $region22: #{tpu_custom_call.1} parent=19 // pred_check_branch
          %125 = sbr.rel (%p123) target = $region24
        $region23: #{tpu_custom_call.1} parent=19 // pred_region
          %s126 = sand.u32 %s38, 1
          %s127 = scalar_lea.sflag [#allocation3], %s126
          %s128 = sand.u32 %s38, 1
          %s129 = smul.addr %s128, 8
          %s130 = scalar_lea.vmem [#allocation2], %s129
          %s131 = smul.u32 2, %s22
          %s133 = ssub.s32 128, 128
          %134 = vsyncadd %s127, %s133
          %s135 = smul.addr %s21, 2
          %s136 = sadd.s32 %s131, %s135
          %s137 = smul.addr %s136, 64
          %s138 = scalar_lea.hbm %s0, %s137
          %s140 = sshll.u32 %s130, 4
          %s141 = int_to_ptr.vmem [resolvable:$true] %s140
          %143 = dma.hbm_to_vmem [thread:$0]  %s138, 128, %s141, %s127
        $region24: #{tpu_custom_call.1} parent=19 // pred_fallthru
          _
      $region20: #{tpu_custom_call.1} parent=5 // pred_fallthru
        _
      %p144 = scmp.le.s32.totalorder 1, %s14
      %p145 = scmp.lt.s32.totalorder %s14, 3
      %p146 = pnand %p144, %p145
      %p147 = pneg %p146
      // Predicated region
      $region25: #{tpu_custom_call.1} parent=5 // pred_check
        _
      $region26: #{tpu_custom_call.1} parent=5 // pred_check_branch
        %149 = sbr.rel (%p146) target = $region28
      $region27: #{tpu_custom_call.1} parent=5 // pred_region
        %s150 = ssub.s32 %s14, 1
        %s151 = sand.u32 %s41, 1
        %s152 = scalar_lea.sflag [#allocation3], %s151
        %s153 = sand.u32 %s41, 1
        %s154 = smul.addr %s153, 8
        %s155 = scalar_lea.vmem [#allocation2], %s154
        // Predicated region
        $region29: #{tpu_custom_call.1} parent=27 // pred_check
          %p156 = pneg %p54
        $region30: #{tpu_custom_call.1} parent=27 // pred_check_branch
          %158 = sbr.rel (%p156) target = $region32
        $region31: #{tpu_custom_call.1} parent=27 // pred_region
          %159 = dma.done %s152, 128
        $region32: #{tpu_custom_call.1} parent=27 // pred_fallthru
          _
        %s160 = sand.u32 %s41, 1
        %s161 = scalar_lea.sflag [#allocation3], %s160
        %s162 = sand.u32 %s41, 1
        %s163 = smul.addr %s162, 8
        %s164 = scalar_lea.vmem [#allocation2], %s163
        %p165 = pneg %p54
        %p166 = pneg %p51
        %p167 = pneg %p75
        %p168 = pneg %p72
        %p169 = pneg %p101
        %p170 = pneg %p98
        %s171 = sand.u32 %s88, 1
        %s172 = scalar_lea.sflag [#allocation4], %s171
        %s173 = sand.u32 %s88, 1
        %s174 = scalar_lea.vmem [#allocation5], %s173
        %s175 = smul.u32 2, %s24
        %p176 = scmp.eq.s32.totalorder %s24, 0
        // Predicated region
        $region33: #{tpu_custom_call.1} parent=27 // pred_check
          %p177 = pneg %p176
        $region34: #{tpu_custom_call.1} parent=27 // pred_check_branch
          %179 = sbr.rel (%p177) target = $region36
        $region35: #{tpu_custom_call.1} parent=27 // pred_region
          %vm180 = vcmask 24576
          %181 = vst.msk [vmem:[%s174] sm:$0x1] %vm180, 0.0
        $region36: #{tpu_custom_call.1} parent=27 // pred_fallthru
          _
        %v182 = vld [vmem:[%s174] sm:$0x1]
        %v183 = vld [vmem:[%s155] sm:$0xff]
        %v185 = vcombine.high %v183, %v183
        %vm187 = vcmask 1043456
        %v188 = vsel %vm187, %v183, 0.0
        %v189 = vsel %vm187, %v185, 0.0
        %v190 = vadd.f32 %v188, %v189
        %191 = vadd.xlane.f32.xlu0 %v190
        %v192 = vpop.xlane.xlu0 %191
        %v194 = vlaneseq
        %v195 = vshrl.u32 %v194, 7
        %v196 = vsub.s32 0, %v195
        %v197 = vrot.slane %v192, %v196
        %v198 = vlaneseq
        %v199 = vshrl.u32 %v198, 7
        %v200 = vsub.s32 1, %v199
        %v201 = vrot.slane %v192, %v200
        %v202 = vlaneseq
        %v203 = vshrl.u32 %v202, 7
        %v204 = vsub.s32 2, %v203
        %v205 = vrot.slane %v192, %v204
        %v206 = vlaneseq
        %v207 = vshrl.u32 %v206, 7
        %v208 = vsub.s32 3, %v207
        %v209 = vrot.slane %v192, %v208
        %v210 = vcombine.low %v197, %v201
        %v211 = vcombine.low %v205, %v209
        %v213 = vunpack.c.l.s4 1966171168
        %v214 = vunpack.c.0.s8 %v213
        %v215 = vlaneseq
        %v216 = vshrl.u32 %v215, 7
        %v217 = vsub.s32 %v214, %v216
        %v218 = vrot.slane %v210, %v217
        %v220 = vunpack.c.l.s4 1966171168
        %v221 = vunpack.c.0.s8 %v220
        %v222 = vlaneseq
        %v223 = vshrl.u32 %v222, 7
        %v224 = vsub.s32 %v221, %v223
        %v225 = vrot.slane %v211, %v224
        %v226 = vcombine.low %v218, %v225
        %v228 = vunpack.c.l.s4 1966171168
        %v229 = vunpack.c.0.s8 %v228
        %v230 = vlaneseq
        %v231 = vshrl.u32 %v230, 7
        %v232 = vsub.s32 %v229, %v231
        %v233 = vrot.slane %v226, %v232
        %234 = vset.pattern.permute.xlu0 0
        %235 = vperm.xlu0 %234, %v233
        %v236 = vpop.permute.xlu0 %235
        %v237 = vlaneseq
        %v238 = vand.u32 %v237, 127
        %v239 = vlaneseq
        %v240 = vshrl.u32 %v239, 7
        %v241 = vsub.s32 %v238, %v240
        %v242 = vrot.slane %v236, %v241
        %v244 = vunpack.c.l.s4 1966171168
        %v245 = vunpack.c.0.s8 %v244
        %v246 = vlaneseq
        %v247 = vshrl.u32 %v246, 7
        %v248 = vsub.s32 %v245, %v247
        %v249 = vrot.slane %v242, %v248
        %v251 = vunpack.c.l.s4 1966171168
        %v252 = vunpack.c.0.s8 %v251
        %v253 = vlaneseq
        %v254 = vshrl.u32 %v253, 7
        %v255 = vsub.s32 %v252, %v254
        %v256 = vrot.slane %v249, %v255
        %v258 = vadd.f32 %v182, %v256
        %vm259 = vcmask 24576
        %260 = vst.msk [vmem:[%s174] sm:$0x1] %vm259, %v258
        // Predicated region
        $region37: #{tpu_custom_call.1} parent=27 // pred_check
          %p261 = pneg %p176
        $region38: #{tpu_custom_call.1} parent=27 // pred_check_branch
          %263 = sbr.rel (%p261) target = $region40
        $region39: #{tpu_custom_call.1} parent=27 // pred_region
          %v264 = vld [vmem:[%s174] sm:$0x1]
          %v265 = vmul.f32 %v264, 0.00390625
          %vm266 = vcmask 1047584
          %267 = vrot.lane.b32.xlu0 %v265, 4
          %v268 = vpop.permute.xlu0 %267
          %v269 = vsel %vm266, %v268, %v265
          %270 = vrot.lane.b32.xlu0 %v269, 4
          %v271 = vpop.permute.xlu0 %270
          %v272 = vsel %vm266, %v271, %v265
          %v273 = vadd.s32 %v238, 4294967295
          %vm274 = vcmp.ge.s32.totalorder %v273, 0
          %vm275 = vcmp.lt.s32.totalorder %v273, 4
          %vm276 = vmand %vm274, %vm275
          %v277 = vld [vmem:[%s1] sm:$0x1]
          %279 = vrot.lane.b32.xlu0 %v272, 125
          %v280 = vpop.permute.xlu0 %279
          %v282 = vsel %vm276, %v280, 0.0
          %v283 = vmul.f32 %v277, %v282
          %v284 = vadd.f32 %v283, 0.0
          %vm285 = vcmp.ge.s32.totalorder %v238, 0
          %vm286 = vcmp.lt.s32.totalorder %v238, 4
          %vm287 = vmand %vm285, %vm286
          %s288 = scalar_lea.vmem %s1, 1
          %v289 = vld [vmem:[%s288] sm:$0x1]
          %v290 = vsel %vm287, %v265, 0.0
          %v291 = vmul.f32 %v289, %v290
          %v292 = vadd.f32 %v284, %v291
          %v293 = vadd.s32 %v238, 1
          %vm294 = vcmp.ge.s32.totalorder %v293, 0
          %vm295 = vcmp.lt.s32.totalorder %v293, 4
          %vm296 = vmand %vm294, %vm295
          %s297 = scalar_lea.vmem %s1, 2
          %v298 = vld [vmem:[%s297] sm:$0x1]
          %299 = vrot.lane.b32.xlu0 %v272, 127
          %v300 = vpop.permute.xlu0 %299
          %v302 = vsel %vm296, %v300, 0.0
          %v303 = vmul.f32 %v298, %v302
          %v304 = vadd.f32 %v292, %v303
          %v305 = vxor.u32 %v304, 2147483648
          %v306 = vmul.f32 %v305, 1.442695
          %v307 = vpow.pop %v306
          %v308 = vadd.f32 %v307, 1.0
          %v309 = vrcp.pop %v308
          %v310 = vmul.f32 1.0, %v309
          %311 = vst.msk [vmem:[%s174] sm:$0x1] %vm259, %v310
        $region40: #{tpu_custom_call.1} parent=27 // pred_fallthru
          _
        %s312 = sand.u32 %s88, 1
        %s313 = scalar_lea.sflag [#allocation4], %s312
        %s314 = sand.u32 %s88, 1
        %s315 = scalar_lea.vmem [#allocation5], %s314
        // Predicated region
        $region41: #{tpu_custom_call.1} parent=27 // pred_check
          %p316 = pneg %p98
        $region42: #{tpu_custom_call.1} parent=27 // pred_check_branch
          %318 = sbr.rel (%p316) target = $region44
        $region43: #{tpu_custom_call.1} parent=27 // pred_region
          %s320 = ssub.s32 16, 16
          %321 = vsyncadd %s313, %s320
          %s322 = smul.addr %s23, 16
          %s323 = scalar_lea.hbm %s2, %s322
          %s325 = sshll.u32 %s315, 4
          %s326 = int_to_ptr.vmem [resolvable:$true] %s325
          %328 = dma.vmem_to_hbm [thread:$0]  %s326, 16, %s323, %s313
        $region44: #{tpu_custom_call.1} parent=27 // pred_fallthru
          _
      $region28: #{tpu_custom_call.1} parent=5 // pred_fallthru
        _
      %p329 = scmp.le.s32.totalorder 2, %s14
      // Predicated region
      $region45: #{tpu_custom_call.1} parent=5 // pred_check
        %p330 = pneg %p329
      $region46: #{tpu_custom_call.1} parent=5 // pred_check_branch
        %332 = sbr.rel (%p330) target = $region48
      $region47: #{tpu_custom_call.1} parent=5 // pred_region
        %s333 = ssub.s32 %s14, 2
        // Predicated region
        $region49: #{tpu_custom_call.1} parent=47 // pred_check
          %p334 = pneg %p104
        $region50: #{tpu_custom_call.1} parent=47 // pred_check_branch
          %336 = sbr.rel (%p334) target = $region52
        $region51: #{tpu_custom_call.1} parent=47 // pred_region
          %s337 = sand.u32 %s89, 1
          %s338 = scalar_lea.sflag [#allocation4], %s337
          %s339 = sand.u32 %s89, 1
          %s340 = scalar_lea.vmem [#allocation5], %s339
          %341 = dma.done %s338, 16
        $region52: #{tpu_custom_call.1} parent=47 // pred_fallthru
          _
      $region48: #{tpu_custom_call.1} parent=5 // pred_fallthru
        _
    $region6: #{tpu_custom_call.1} parent=1 // loop_footer
      %s18 = sadd.s32 1, %s14
    $region7: #{tpu_custom_call.1} parent=1 // loop_footer_branch
      %13 = sbr.rel target = $region3
    $region8: #{tpu_custom_call.1} parent=1 // loop_exit
      _
    %342 = vsyncpa [#allocation3], 1
    %s343 = scalar_lea.sflag [#allocation3], 1
    %344 = vsyncpa %s343, 1
    %345 = vsyncpa [#allocation4], 1
    %s346 = scalar_lea.sflag [#allocation4], 1
    %347 = vsyncpa %s346, 1

</llo_original>
